<compile_context>
chip_gen: v5e
topology: v5e:2x2
jax: 0.10.0
libtpu: 0.0.40
codegen_flags: <defaults>
</compile_context>

<pallas_src>
import functools
import math

import jax
import jax.numpy as jnp
from jax.experimental import pallas as pl
from jax.experimental.pallas import tpu as pltpu

# ---- static packed-parameter layout (hidden = 128, lane width = 128) -----------------
HIDDEN = 128      # hidden width of the DQN MLP
LANE = 128        # lane width of the packed parameter buffer
IN_MAX = 16       # max supported n_observations (one 16-row aligned region)
N_OUT = 8         # padded logits width stored to HBM (n_actions <= 8)

# All region starts are multiples of 16 so both f32 (8,128) and bf16 (16,128)
# sublane tiles stay aligned (no mid-tile slices of the packed buffer).
ROW_W1 = 0                    # rows [0, 16)    : w1 (only first n_obs rows non-zero)
ROW_B1 = ROW_W1 + IN_MAX      # rows [16, 32)   : b1 in row 16
ROW_W2 = ROW_B1 + 16          # rows [32, 160)  : w2
ROW_B2 = ROW_W2 + HIDDEN      # rows [160, 176) : b2 in row 160
ROW_W3 = ROW_B2 + 16          # rows [176, 304) : w3 (cols >= n_actions are zero)
ROW_B3 = ROW_W3 + HIDDEN      # rows [304, 320) : b3 in row 304 (cols >= n_actions zero)
N_ROWS = ROW_B3 + 16          # 320 rows -> 160 KB f32 / 80 KB bf16


def _round_up(x, m):
    return ((x + m - 1) // m) * m


def _choose_tile(batch, tile_b):
    """Batch tile: multiple of 8, <= tile_b, and >=2 grid steps when batch allows
    (gives the 2nd TensorCore on v7x work; harmless on single-TC v5e/v6e)."""
    b8 = _round_up(batch, 8)
    tb = min(_round_up(max(tile_b, 8), 8), b8)
    if b8 >= 16:
        tb = min(tb, _round_up((b8 + 1) // 2, 8))
    return max(tb, 8)


# ---- kernels --------------------------------------------------------------------------
def _mlp_f32(x_ref, p_ref, n_obs):
    """Shared MLP body: returns the f32 [tb, 128] layer-3 output (pre-slice)."""
    cdt = p_ref.dtype  # compute dtype == packed-parameter dtype (f32 or bf16)
    x = x_ref[...].astype(cdt)                         # [tb, n_obs]

    # Static, tile-aligned slices of the VMEM-resident packed parameter buffer.
    w1 = p_ref[ROW_W1:ROW_W1 + n_obs, :]               # [n_obs, 128]
    b1 = p_ref[ROW_B1:ROW_B1 + 1, :]                   # [1, 128]
    w2 = p_ref[ROW_W2:ROW_W2 + HIDDEN, :]              # [128, 128]
    b2 = p_ref[ROW_B2:ROW_B2 + 1, :]                   # [1, 128]
    w3 = p_ref[ROW_W3:ROW_W3 + HIDDEN, :]              # [128, 128] (pad cols zero)
    b3 = p_ref[ROW_B3:ROW_B3 + 1, :]                   # [1, 128]   (pad cols zero)

    # Matmuls in the packed dtype with f32 MXU accumulation; bias-add / ReLU in f32.
    h1 = jnp.dot(x, w1, preferred_element_type=jnp.float32)
    h1 = jnp.maximum(h1 + b1.astype(jnp.float32), 0.0)
    h2 = jnp.dot(h1.astype(cdt), w2, preferred_element_type=jnp.float32)
    h2 = jnp.maximum(h2 + b2.astype(jnp.float32), 0.0)
    out = jnp.dot(h2.astype(cdt), w3, preferred_element_type=jnp.float32)
    return out + b3.astype(jnp.float32)                # [tb, 128] f32


def dqn_kernel(x_ref, p_ref, out_ref, *, n_obs):
    q = _mlp_f32(x_ref, p_ref, n_obs)
    # Narrow store: only the first N_OUT lanes go to HBM.
    out_ref[...] = q[:, :out_ref.shape[1]].astype(out_ref.dtype)


def dqn_argmax_kernel(x_ref, p_ref, act_ref, *, n_obs, n_actions):
    q = _mlp_f32(x_ref, p_ref, n_obs)
    col = jax.lax.broadcasted_iota(jnp.int32, q.shape, 1)
    masked = jnp.where(col < n_actions, q, -jnp.inf)
    qmax = jnp.max(masked, axis=-1, keepdims=True)
    idx = jnp.where(masked == qmax, col, q.shape[-1])          # first-max index
    act_ref[...] = jnp.min(idx, axis=-1, keepdims=True).astype(jnp.int32)


# ---- wrappers -------------------------------------------------------------------------
def _common_call(kernel_fn, x, packed, out_width, out_dtype, tile_b, vmem_limit_bytes):
    B, n_obs = x.shape
    assert n_obs <= IN_MAX, "pack layout assumes n_observations <= 16"

    x = x.astype(jnp.float32)
    tb = _choose_tile(B, tile_b)
    B_pad = _round_up(B, tb)
    if B_pad != B:
        x = jnp.pad(x, ((0, B_pad - B), (0, 0)))

    cp_kwargs = dict(dimension_semantics=("parallel",))
    if vmem_limit_bytes is not None:
        cp_kwargs["vmem_limit_bytes"] = vmem_limit_bytes

    out = pl.pallas_call(
        kernel_fn,
        out_shape=jax.ShapeDtypeStruct((B_pad, out_width), out_dtype),
        grid=(B_pad // tb,),
        in_specs=[
            pl.BlockSpec((tb, n_obs), lambda i: (i, 0)),        # activations per tile
            pl.BlockSpec((N_ROWS, LANE), lambda i: (0, 0)),     # packed params: resident
        ],
        out_specs=pl.BlockSpec((tb, out_width), lambda i: (i, 0)),  # narrow output
        compiler_params=pltpu.CompilerParams(**cp_kwargs),
    )(x, packed)
    return out, B


def dqn_forward(x, packed, n_actions, *, tile_b=2048, vmem_limit_bytes=None):
    """x: [B, n_observations] f32, packed: [320, 128] (f32 or bf16) -> [B, n_actions] f32."""
    assert n_actions <= N_OUT
    n_obs = x.shape[1]
    out, B = _common_call(
        functools.partial(dqn_kernel, n_obs=n_obs),
        x, packed, N_OUT, jnp.float32, tile_b, vmem_limit_bytes)
    return out[:B, :n_actions]


def dqn_select_action(x, packed, n_actions, *, tile_b=1024, vmem_limit_bytes=None):
    """Latency path: fused argmax over Q-values -> [B] int32 greedy actions."""
    assert n_actions <= N_OUT
    n_obs = x.shape[1]
    acts, B = _common_call(
        functools.partial(dqn_argmax_kernel, n_obs=n_obs, n_actions=n_actions),
        x, packed, 1, jnp.int32, tile_b, vmem_limit_bytes)
    return acts[:B, 0]


# ---- parameter init / packing ---------------------------------------------------------
def init_dqn_params(key, n_observations, n_actions, hidden=HIDDEN):
    """Deterministic init matching PyTorch nn.Linear default:
    U(-1/sqrt(fan_in), 1/sqrt(fan_in)) for both weight and bias."""
    keys = jax.random.split(key, 6)

    def linear(kw, kb, fan_in, fan_out):
        bound = 1.0 / math.sqrt(fan_in)
        w = jax.random.uniform(kw, (fan_in, fan_out), jnp.float32, -bound, bound)
        b = jax.random.uniform(kb, (1, fan_out), jnp.float32, -bound, bound)
        return w, b

    w1, b1 = linear(keys[0], keys[1], n_observations, hidden)
    w2, b2 = linear(keys[2], keys[3], hidden, hidden)
    w3, b3 = linear(keys[4], keys[5], hidden, n_actions)
    return (w1, b1, w2, b2, w3, b3)


def pack_dqn_params(params, n_observations, n_actions, dtype=jnp.float32):
    """Pack (w1,b1,w2,b2,w3,b3) into one [320, 128] buffer in the compute dtype."""
    w1, b1, w2, b2, w3, b3 = params
    packed = jnp.zeros((N_ROWS, LANE), jnp.float32)
    packed = packed.at[ROW_W1:ROW_W1 + n_observations, :].set(w1)
    packed = packed.at[ROW_B1, :].set(b1[0])
    packed = packed.at[ROW_W2:ROW_W2 + HIDDEN, :].set(w2)
    packed = packed.at[ROW_B2, :].set(b2[0])
    packed = packed.at[ROW_W3:ROW_W3 + HIDDEN, :n_actions].set(w3)
    packed = packed.at[ROW_B3, :n_actions].set(b3[0])
    return packed.astype(dtype)


def dqn_reference(x, params):
    w1, b1, w2, b2, w3, b3 = params
    h1 = jax.nn.relu(x @ w1 + b1)
    h2 = jax.nn.relu(h1 @ w2 + b2)
    return h2 @ w3 + b3


if __name__ == "__main__":
    # CartPole-v1: n_observations = 4, n_actions = 2
    n_observations, n_actions = 4, 2

    key = jax.random.PRNGKey(0)
    kx, kp, kx2 = jax.random.split(key, 3)
    params = init_dqn_params(kp, n_observations, n_actions)
    packed_f32 = pack_dqn_params(params, n_observations, n_actions, dtype=jnp.float32)
    packed_bf16 = pack_dqn_params(params, n_observations, n_actions, dtype=jnp.bfloat16)

    # --- small per-step inference batch (single grid step), exact f32 path ---
    batch = 8
    x = jax.random.normal(kx, (batch, n_observations), dtype=jnp.float32)
    out = jax.block_until_ready(dqn_forward(x, packed_f32, n_actions))
    ref = dqn_reference(x, params)
    assert out.shape == (batch, n_actions)
    assert jnp.allclose(out, ref, atol=1e-5, rtol=1e-5)

    # --- fused argmax (greedy action-selection) path ---
    acts = jax.block_until_ready(dqn_select_action(x, packed_f32, n_actions))
    assert acts.shape == (batch,)
    assert jnp.array_equal(acts, jnp.argmax(ref, axis=-1).astype(jnp.int32))

    # --- training-style batch (ragged B -> 2 grid steps), f32 and bf16-packed paths ---
    batch2 = 300
    x2 = jax.random.normal(kx2, (batch2, n_observations), dtype=jnp.float32)
    out2_f32 = jax.block_until_ready(dqn_forward(x2, packed_f32, n_actions))
    out2_bf16 = jax.block_until_ready(dqn_forward(x2, packed_bf16, n_actions))
    ref2 = dqn_reference(x2, params)
    assert out2_f32.shape == (batch2, n_actions)
    assert jnp.allclose(out2_f32, ref2, atol=1e-5, rtol=1e-5)
    assert jnp.allclose(out2_bf16, ref2, atol=2e-2, rtol=2e-2)

    print("KERNEL_OK")
</pallas_src>

<mosaic_0001>
module attributes {stable_mosaic.version = 11 : i64} {
  func.func @dqn_kernel(%arg0: i32, %arg1: memref<8x4xf32, #tpu.memory_space<vmem>>, %arg2: memref<320x128xf32, #tpu.memory_space<vmem>>, %arg3: memref<8x8xf32, #tpu.memory_space<vmem>>) attributes {dimension_semantics = [#tpu.dimension_semantics<parallel>], iteration_bounds = array<i64: 1>, scalar_prefetch = 0 : i64, scratch_operands = 0 : i64, tpu.core_type = #tpu.core_type<tc>, window_params = [{transform_indices = @transform_0, window_bounds = array<i64: 8, 4>}, {pipeline_mode = #tpu.pipeline_mode<synchronous>, transform_indices = @transform_1, window_bounds = array<i64: 320, 128>}, {transform_indices = @transform_2, window_bounds = array<i64: 8, 8>}]} {
    %c0 = arith.constant 0 : index
    %c0_0 = arith.constant 0 : index
    %0 = vector.load %arg1[%c0, %c0_0] : memref<8x4xf32, #tpu.memory_space<vmem>>, vector<8x4xf32>
    %c0_1 = arith.constant 0 : index
    %c0_2 = arith.constant 0 : index
    %1 = vector.load %arg2[%c0_1, %c0_2] : memref<320x128xf32, #tpu.memory_space<vmem>>, vector<4x128xf32>
    %c16 = arith.constant 16 : index
    %c0_3 = arith.constant 0 : index
    %2 = vector.load %arg2[%c16, %c0_3] : memref<320x128xf32, #tpu.memory_space<vmem>>, vector<1x128xf32>
    %c32 = arith.constant 32 : index
    %c0_4 = arith.constant 0 : index
    %3 = vector.load %arg2[%c32, %c0_4] : memref<320x128xf32, #tpu.memory_space<vmem>>, vector<128x128xf32>
    %c160 = arith.constant 160 : index
    %c0_5 = arith.constant 0 : index
    %4 = vector.load %arg2[%c160, %c0_5] : memref<320x128xf32, #tpu.memory_space<vmem>>, vector<1x128xf32>
    %c176 = arith.constant 176 : index
    %c0_6 = arith.constant 0 : index
    %5 = vector.load %arg2[%c176, %c0_6] : memref<320x128xf32, #tpu.memory_space<vmem>>, vector<128x128xf32>
    %c304 = arith.constant 304 : index
    %c0_7 = arith.constant 0 : index
    %6 = vector.load %arg2[%c304, %c0_7] : memref<320x128xf32, #tpu.memory_space<vmem>>, vector<1x128xf32>
    %cst = arith.constant dense<0.000000e+00> : vector<8x128xf32>
    %7 = tpu.matmul %0, %1, %cst {dimension_numbers = #tpu.dot_dimension_numbers<[1], [0], [0], [1], [0, 0, 1, 1], [], []>} : vector<8x4xf32>, vector<4x128xf32>, vector<8x128xf32> -> vector<8x128xf32>
    %8 = vector.broadcast %2 : vector<1x128xf32> to vector<8x128xf32>
    %9 = arith.addf %7, %8 : vector<8x128xf32>
    %cst_8 = arith.constant 0.000000e+00 : f32
    %10 = vector.broadcast %cst_8 : f32 to vector<8x128xf32>
    %11 = arith.maximumf %9, %10 : vector<8x128xf32>
    %cst_9 = arith.constant dense<0.000000e+00> : vector<8x128xf32>
    %12 = tpu.matmul %11, %3, %cst_9 {dimension_numbers = #tpu.dot_dimension_numbers<[1], [0], [0], [1], [0, 0, 1, 1], [], []>} : vector<8x128xf32>, vector<128x128xf32>, vector<8x128xf32> -> vector<8x128xf32>
    %13 = vector.broadcast %4 : vector<1x128xf32> to vector<8x128xf32>
    %14 = arith.addf %12, %13 : vector<8x128xf32>
    %cst_10 = arith.constant 0.000000e+00 : f32
    %15 = vector.broadcast %cst_10 : f32 to vector<8x128xf32>
    %16 = arith.maximumf %14, %15 : vector<8x128xf32>
    %cst_11 = arith.constant dense<0.000000e+00> : vector<8x128xf32>
    %17 = tpu.matmul %16, %5, %cst_11 {dimension_numbers = #tpu.dot_dimension_numbers<[1], [0], [0], [1], [0, 0, 1, 1], [], []>} : vector<8x128xf32>, vector<128x128xf32>, vector<8x128xf32> -> vector<8x128xf32>
    %18 = vector.broadcast %6 : vector<1x128xf32> to vector<8x128xf32>
    %19 = arith.addf %17, %18 : vector<8x128xf32>
    %20 = vector.extract_strided_slice %19 {offsets = [0, 0], sizes = [8, 8], strides = [1, 1]} : vector<8x128xf32> to vector<8x8xf32>
    %c0_12 = arith.constant 0 : index
    %c0_13 = arith.constant 0 : index
    %21 = vector.load %arg3[%c0_12, %c0_13] : memref<8x8xf32, #tpu.memory_space<vmem>>, vector<8x8xf32>
    tpu.vector_store %arg3[%c0_12, %c0_13], %20 {strides = array<i32>} : memref<8x8xf32, #tpu.memory_space<vmem>>, vector<8x8xf32>,
    return
  }
  func.func @transform_0(%arg0: i32) -> (i32, i32) {
    %c0_i32 = arith.constant 0 : i32
    %c0_i32_0 = arith.constant 0 : i32
    return %arg0, %c0_i32 : i32, i32
  }
  func.func @transform_1(%arg0: i32) -> (i32, i32) {
    %c0_i32 = arith.constant 0 : i32
    %c0_i32_0 = arith.constant 0 : i32
    %c0_i32_1 = arith.constant 0 : i32
    return %c0_i32, %c0_i32_0 : i32, i32
  }
  func.func @transform_2(%arg0: i32) -> (i32, i32) {
    %c0_i32 = arith.constant 0 : i32
    %c0_i32_0 = arith.constant 0 : i32
    return %arg0, %c0_i32 : i32, i32
  }
}

</mosaic_0001>

<llo_original>
// kernel: tpu_custom_call.1
$region0: #{tpu_custom_call.1}
  #allocation0 [shape = 'u32[]', space=smem, size = 0x4, offset = 0x4, fixed_abs, tag = 'smem constant byte address 0x4 - core index']
  #allocation1 [shape = 'u32[72,128]{1,0:T(1,128)}', space=vmem, size = 0x9000, scoped, tag = 'internal scratch']
  %s0 = inlined_call_operand.vmem [shape: f32[8,4], index: 0, kind: input, shape index: {}]
  %s1 = inlined_call_operand.hbm [shape: f32[320,128], index: 1, kind: input, shape index: {}]
  %s2 = inlined_call_operand.hbm [shape: f32[8,8], index: 2, kind: output, shape index: {}]
  %s3 = sld [smem:[#allocation0]]
  $region22: #{tpu_custom_call.1} parent=0
    _
  %s5 = ssub.s32 1, %s3
  %s6 = scalar_select 0, %s5, %s3
  $region1: #{tpu_custom_call.1} parent=0
    #allocation2 [shape = 'u8[163840]{0}', space=vmem, size = 0x28000, scoped, tag = 'input window, operand 1, single buffered']
    #allocation3 [shape = 's32[1]{0}', space=sflag, size = 0x4, scoped, tag = 'scoped memory for tpu_custom_call.1']
    #allocation4 [shape = 's32[1]{0}', space=sflag, size = 0x4, scoped, tag = 'scoped memory for tpu_custom_call.1']
    #allocation5 [shape = 'u8[4096]{0}', space=vmem, size = 0x1000, scoped, tag = 'output window, operand 0, single buffered']
    %7 = vsyncpa [#allocation3], 0
    %8 = vsyncpa [#allocation4], 0
    // Predicated region
    $region2: #{tpu_custom_call.1} parent=1 // pred_check
      _
    $region3: #{tpu_custom_call.1} parent=1 // pred_check_branch
      %10 = sbr.rel (0) target = $region5
    $region4: #{tpu_custom_call.1} parent=1 // pred_region
      _
    $region5: #{tpu_custom_call.1} parent=1 // pred_fallthru
      _
    // Predicated region
    $region6: #{tpu_custom_call.1} parent=1 // pred_check
      _
    $region7: #{tpu_custom_call.1} parent=1 // pred_check_branch
      %12 = sbr.rel (0) target = $region9
    $region8: #{tpu_custom_call.1} parent=1 // pred_region
      %14 = vsyncadd [#allocation3], 0
      %s15 = sshll.u32 %s1, 4
      %s16 = int_to_ptr.hbm [resolvable:$true] %s15
      %s17 = sshll.u32 [#allocation2], 4
      %s18 = int_to_ptr.vmem [resolvable:$true] %s17
      %23 = dma.hbm_to_vmem [thread:$0]  %s16, 5120, %s18, [#allocation3], 128, 128, 8
    $region9: #{tpu_custom_call.1} parent=1 // pred_fallthru
      _
    // Predicated region
    $region10: #{tpu_custom_call.1} parent=1 // pred_check
      _
    $region11: #{tpu_custom_call.1} parent=1 // pred_check_branch
      %25 = sbr.rel (0) target = $region13
    $region12: #{tpu_custom_call.1} parent=1 // pred_region
      %27 = dma.done [#allocation3], 5120
    $region13: #{tpu_custom_call.1} parent=1 // pred_fallthru
      _
    %v28 = vld [vmem:[%s0] sm:$0xff]
    %v29 = vld [vmem:[#allocation2] sm:$0xf]
    %v30 = vld [vmem:[#allocation2 + $0x10] sm:$0x1]
    %v31 = vld [vmem:[#allocation2 + $0x20] sm:$0xff]
    %v32 = vld [vmem:[#allocation2 + $0x28] sm:$0xff]
    %v33 = vld [vmem:[#allocation2 + $0x30] sm:$0xff]
    %v34 = vld [vmem:[#allocation2 + $0x38] sm:$0xff]
    %v35 = vld [vmem:[#allocation2 + $0x40] sm:$0xff]
    %v36 = vld [vmem:[#allocation2 + $0x48] sm:$0xff]
    %v37 = vld [vmem:[#allocation2 + $0x50] sm:$0xff]
    %v38 = vld [vmem:[#allocation2 + $0x58] sm:$0xff]
    %v39 = vld [vmem:[#allocation2 + $0x60] sm:$0xff]
    %v40 = vld [vmem:[#allocation2 + $0x68] sm:$0xff]
    %v41 = vld [vmem:[#allocation2 + $0x70] sm:$0xff]
    %v42 = vld [vmem:[#allocation2 + $0x78] sm:$0xff]
    %v43 = vld [vmem:[#allocation2 + $0x80] sm:$0xff]
    %v44 = vld [vmem:[#allocation2 + $0x88] sm:$0xff]
    %v45 = vld [vmem:[#allocation2 + $0x90] sm:$0xff]
    %v46 = vld [vmem:[#allocation2 + $0x98] sm:$0xff]
    %v47 = vld [vmem:[#allocation2 + $0xa0] sm:$0x1]
    %v48 = vld [vmem:[#allocation2 + $0xb0] sm:$0xff]
    %v49 = vld [vmem:[#allocation2 + $0xb8] sm:$0xff]
    %v50 = vld [vmem:[#allocation2 + $0xc0] sm:$0xff]
    %v51 = vld [vmem:[#allocation2 + $0xc8] sm:$0xff]
    %v52 = vld [vmem:[#allocation2 + $0xd0] sm:$0xff]
    %v53 = vld [vmem:[#allocation2 + $0xd8] sm:$0xff]
    %v54 = vld [vmem:[#allocation2 + $0xe0] sm:$0xff]
    %v55 = vld [vmem:[#allocation2 + $0xe8] sm:$0xff]
    %v56 = vld [vmem:[#allocation2 + $0xf0] sm:$0xff]
    %v57 = vld [vmem:[#allocation2 + $0xf8] sm:$0xff]
    %v58 = vld [vmem:[#allocation2 + $0x100] sm:$0xff]
    %v59 = vld [vmem:[#allocation2 + $0x108] sm:$0xff]
    %v60 = vld [vmem:[#allocation2 + $0x110] sm:$0xff]
    %v61 = vld [vmem:[#allocation2 + $0x118] sm:$0xff]
    %v62 = vld [vmem:[#allocation2 + $0x120] sm:$0xff]
    %v63 = vld [vmem:[#allocation2 + $0x128] sm:$0xff]
    %v64 = vld [vmem:[#allocation2 + $0x130] sm:$0x1]
    %v65 = vperm.slane %v30, 0
    %vm66 = vcmask 31744
    %v68 = vsel %vm66, %v28, 0
    %vm70 = vcmask 1043456
    %v72 = vsel %vm70, %v29, 0
    %74 = vmatpush.msra.mxu0 0.0
    %75 = vmatpush.msra.mxu0 0.0
    %76 = vmatpush.msra.mxu0 0.0
    %77 = vmatpush.msra.mxu0 0.0
    %78 = vmatpush.msra.mxu0 0.0
    %79 = vmatpush.msra.mxu0 0.0
    %80 = vmatpush.msra.mxu0 0.0
    %81 = vmatpush.msra.mxu0 0.0
    %82 = vmatpush.msra.mxu0 0.0
    %83 = vmatpush.msra.mxu0 0.0
    %84 = vmatpush.msra.mxu0 0.0
    %85 = vmatpush.msra.mxu0 0.0
    %86 = vmatpush.msra.mxu0 0.0
    %87 = vmatpush.msra.mxu0 0.0
    %88 = vmatpush.msra.mxu0 0.0
    %89 = vmatpush.msra.mxu0 %v72
    %90 = vmatmul.f32.gmra.mxu0 %v68
    %v91 = vpop.f32.mrf.mxu0
    %v92 = vadd.f32 %v65, %v91
    %93 = vdwg.mxu0
    %v94 = vmax.f32 %v92, 0.0
    %v95 = vperm.slane %v47, 0
    %96 = vmatpush.msra.mxu0 %v46
    %97 = vmatpush.msra.mxu0 %v45
    %98 = vmatpush.msra.mxu0 %v44
    %99 = vmatpush.msra.mxu0 %v43
    %100 = vmatpush.msra.mxu0 %v42
    %101 = vmatpush.msra.mxu0 %v41
    %102 = vmatpush.msra.mxu0 %v40
    %103 = vmatpush.msra.mxu0 %v39
    %104 = vmatpush.msra.mxu0 %v38
    %105 = vmatpush.msra.mxu0 %v37
    %106 = vmatpush.msra.mxu0 %v36
    %107 = vmatpush.msra.mxu0 %v35
    %108 = vmatpush.msra.mxu0 %v34
    %109 = vmatpush.msra.mxu0 %v33
    %110 = vmatpush.msra.mxu0 %v32
    %111 = vmatpush.msra.mxu0 %v31
    %112 = vmatmul.f32.gmra.mxu0 %v94
    %v113 = vpop.f32.mrf.mxu0
    %v114 = vadd.f32 %v95, %v113
    %115 = vdwg.mxu0
    %v116 = vmax.f32 %v114, 0.0
    %v117 = vperm.slane %v64, 0
    %118 = vmatpush.msra.mxu0 %v63
    %119 = vmatpush.msra.mxu0 %v62
    %120 = vmatpush.msra.mxu0 %v61
    %121 = vmatpush.msra.mxu0 %v60
    %122 = vmatpush.msra.mxu0 %v59
    %123 = vmatpush.msra.mxu0 %v58
    %124 = vmatpush.msra.mxu0 %v57
    %125 = vmatpush.msra.mxu0 %v56
    %126 = vmatpush.msra.mxu0 %v55
    %127 = vmatpush.msra.mxu0 %v54
    %128 = vmatpush.msra.mxu0 %v53
    %129 = vmatpush.msra.mxu0 %v52
    %130 = vmatpush.msra.mxu0 %v51
    %131 = vmatpush.msra.mxu0 %v50
    %132 = vmatpush.msra.mxu0 %v49
    %133 = vmatpush.msra.mxu0 %v48
    %134 = vmatmul.f32.gmra.mxu0 %v116
    %v135 = vpop.f32.mrf.mxu0
    %v136 = vadd.f32 %v117, %v135
    %137 = vdwg.mxu0
    %vm138 = vcmask 64512
    %139 = vst.msk [vmem:[#allocation5] sm:$0xff] %vm138, %v136
    // Predicated region
    $region14: #{tpu_custom_call.1} parent=1 // pred_check
      _
    $region15: #{tpu_custom_call.1} parent=1 // pred_check_branch
      %141 = sbr.rel (0) target = $region17
    $region16: #{tpu_custom_call.1} parent=1 // pred_region
      %143 = vsyncadd [#allocation4], 0
      %s145 = sshll.u32 [#allocation5], 4
      %s146 = int_to_ptr.vmem [resolvable:$true] %s145
      %s147 = sshll.u32 %s2, 4
      %s148 = int_to_ptr.hbm [resolvable:$true] %s147
      %150 = dma.vmem_to_hbm [thread:$0]  %s146, 128, %s148, [#allocation4]
    $region17: #{tpu_custom_call.1} parent=1 // pred_fallthru
      _
    // Predicated region
    $region18: #{tpu_custom_call.1} parent=1 // pred_check
      _
    $region19: #{tpu_custom_call.1} parent=1 // pred_check_branch
      %152 = sbr.rel (0) target = $region21
    $region20: #{tpu_custom_call.1} parent=1 // pred_region
      %154 = dma.done [#allocation4], 128
    $region21: #{tpu_custom_call.1} parent=1 // pred_fallthru
      _
    %155 = vsyncpa [#allocation3], 1
    %156 = vsyncpa [#allocation4], 1

</llo_original>
